<compile_context>
chip_gen: v6e
topology: v6e:2x2x1
jax: 0.10.0
libtpu: 0.0.40
codegen_flags: <defaults>
</compile_context>

<pallas_src>
import math

import jax
import jax.numpy as jnp
from jax.experimental import pallas as pl
from jax.experimental.pallas import tpu as pltpu

_LANES = 128       # TPU vreg lane width
_SUBLANES = 8      # TPU vreg sublane count
_MAX_TB = 8192     # max batch-lane tile per grid step


def _round_up(n, m):
    return ((n + m - 1) // m) * m


def mlp_kernel(x_ref, p_ref, out_ref):
    """Batch-on-lanes MLP forward for d_in = d_out = 1.

    x_ref:   [1, TB]   batch tile on the lane axis (lane-dense)
    p_ref:   [H, 128]  resident packed params; lane 0 = w1, 1 = b1, 2 = w2
                       (output bias b2 folded into one padded hidden row)
    out_ref: [1, TB]   lane-dense output tile (unmasked full-width stores)
    """
    x = x_ref[...]                        # [1, TB]
    w1 = p_ref[:, 0:1]                    # [H, 1]  loop-invariant columns;
    b1 = p_ref[:, 1:2]                    # [H, 1]  lane-broadcast applies to
    w2 = p_ref[:, 2:3]                    # [H, 1]  weights, not to x.

    # Layer 1 + ReLU: pure VPU elementwise, hidden on sublanes, batch on lanes.
    h = jnp.maximum(w1 * x + b1, 0.0)     # [H, TB]

    # Layer 2: elementwise mul + sublane reduction -> lane-dense [1, TB].
    # (b2 is already folded into a padded hidden row, so no extra add needed.)
    mu = jnp.sum(h * w2, axis=0, keepdims=True)
    out_ref[...] = mu.astype(out_ref.dtype)


def prepare_params(w1, b1, w2, b2, lanes=_LANES):
    """One-time (init-time) parameter packing — hoisted off the forward path.

    w1: [d_hidden, d_in=1], b1: [d_hidden], w2: [d_out=1, d_hidden], b2: [d_out=1]

    Returns a single resident [H, 128] f32 block where H = round_up(d_hidden+1, 8):
      lane 0 = w1 column, lane 1 = b1 column, lane 2 = w2 column.
    The output bias b2 is folded into one extra "hidden unit" (w1=0, b1=1,
    w2=b2): relu(0*x + 1) * b2 == b2. Remaining padded rows are all-zero and
    contribute exactly 0, so the math is identical to the PyTorch module.
    """
    d_hidden, d_in = w1.shape
    d_out = w2.shape[0]
    assert d_in == 1 and d_out == 1, (
        "This kernel is specialised for the module defaults d_in=d_out=1; "
        "non-degenerate dims would use an MXU matmul kernel instead."
    )
    H = _round_up(d_hidden + 1, _SUBLANES)   # +1 row holds the folded b2

    w1c = jnp.zeros((H,), jnp.float32).at[:d_hidden].set(w1[:, 0].astype(jnp.float32))
    b1c = jnp.zeros((H,), jnp.float32).at[:d_hidden].set(b1.astype(jnp.float32))
    b1c = b1c.at[d_hidden].set(1.0)
    w2c = jnp.zeros((H,), jnp.float32).at[:d_hidden].set(w2[0, :].astype(jnp.float32))
    w2c = w2c.at[d_hidden].set(b2[0].astype(jnp.float32))

    packed = jnp.zeros((H, lanes), jnp.float32)
    packed = packed.at[:, 0].set(w1c).at[:, 1].set(b1c).at[:, 2].set(w2c)
    return {"packed": packed}


def _batch_tile(B, max_tb=_MAX_TB, lanes=_LANES):
    """Pick the lane-dense batch tile (multiple of 128).

    - capped at max_tb to bound per-step VMEM / vreg pressure while still
      amortizing the ~0.35 us fixed per-grid-step cost,
    - aims for >= 2 grid steps when B is large enough so v7x's two TensorCores
      both get work through the 'parallel' dimension semantics,
    - B is always padded up to a whole number of tiles (never more than one
      extra tile), replacing the old single-full-extent-block fallback.
    """
    half = _round_up(max(1, (B + 1) // 2), lanes)
    return max(lanes, min(max_tb, half))


def basic_mlp_forward(x, params):
    """x: [B, d_in=1]; params from prepare_params  ->  mu: [B, 1]"""
    B, d_in = x.shape
    assert d_in == 1
    p = params["packed"]                   # [H, 128]
    H = p.shape[0]

    TB = _batch_tile(B)
    B_pad = _round_up(B, TB)
    grid = (B_pad // TB,)

    # [B, 1] -> [1, B] is a free reinterpretation (d_in == 1); pad batch with
    # zeros up to a tile multiple (padded lanes are sliced off below).
    x_row = x.reshape(1, B)
    if B_pad != B:
        x_row = jnp.pad(x_row, ((0, 0), (0, B_pad - B)))

    mu_row = pl.pallas_call(
        mlp_kernel,
        out_shape=jax.ShapeDtypeStruct((1, B_pad), x.dtype),
        grid=grid,
        in_specs=[
            pl.BlockSpec((1, TB), lambda i: (0, i)),    # x: tiled over batch lanes
            pl.BlockSpec((H, _LANES), lambda i: (0, 0)),  # packed params: resident
        ],
        out_specs=pl.BlockSpec((1, TB), lambda i: (0, i)),  # lane-dense output
        compiler_params=pltpu.CompilerParams(
            dimension_semantics=("parallel",),   # batch axis: megacore-shardable
        ),
    )(x_row, p)

    return mu_row[:, :B].reshape(B, 1)


# jit once; all wrapper logic is shape-static so nothing extra runs per call.
basic_mlp_forward_jit = jax.jit(basic_mlp_forward)


def init_params(key, d_in=1, d_out=1, d_hidden=50):
    """Deterministic init mirroring nn.Linear's default (Kaiming-uniform-ish),
    in the PyTorch [out_features, in_features] layout."""
    k1, k2, k3, k4 = jax.random.split(key, 4)
    bound1 = 1.0 / math.sqrt(d_in)
    w1 = jax.random.uniform(k1, (d_hidden, d_in), jnp.float32, -bound1, bound1)
    b1 = jax.random.uniform(k2, (d_hidden,), jnp.float32, -bound1, bound1)
    bound2 = 1.0 / math.sqrt(d_hidden)
    w2 = jax.random.uniform(k3, (d_out, d_hidden), jnp.float32, -bound2, bound2)
    b2 = jax.random.uniform(k4, (d_out,), jnp.float32, -bound2, bound2)
    return w1, b1, w2, b2


if __name__ == "__main__":
    d_in, d_out, d_hidden = 1, 1, 50
    B = 8

    key = jax.random.PRNGKey(0)
    kx, kp = jax.random.split(key)
    x = jax.random.normal(kx, (B, d_in), dtype=jnp.float32)
    w1, b1, w2, b2 = init_params(kp, d_in, d_out, d_hidden)

    # One-time parameter packing (hoisted out of the forward path).
    params = prepare_params(w1, b1, w2, b2)

    mu = basic_mlp_forward_jit(x, params)
    mu = jax.block_until_ready(mu)

    # Reference check against plain JAX with the ORIGINAL (unpadded) params —
    # same math as the PyTorch module's forward.
    ref = jnp.maximum(x @ w1.T + b1, 0.0) @ w2.T + b2
    assert mu.shape == (B, d_out)
    assert jnp.allclose(mu, ref, atol=1e-5, rtol=1e-5), (mu, ref)

    # TODO(synk): BasicMLP.loss (plain MSE) is left to standard JAX; only the
    # forward pass is a kernel.
    print("KERNEL_OK")
</pallas_src>

<mosaic_0001>
module attributes {stable_mosaic.version = 11 : i64} {
  func.func @mlp_kernel(%arg0: i32, %arg1: memref<1x128xf32, #tpu.memory_space<vmem>>, %arg2: memref<56x128xf32, #tpu.memory_space<vmem>>, %arg3: memref<1x128xf32, #tpu.memory_space<vmem>>) attributes {dimension_semantics = [#tpu.dimension_semantics<parallel>], iteration_bounds = array<i64: 1>, scalar_prefetch = 0 : i64, scratch_operands = 0 : i64, tpu.core_type = #tpu.core_type<tc>, window_params = [{transform_indices = @transform_0, window_bounds = array<i64: 1, 128>}, {pipeline_mode = #tpu.pipeline_mode<synchronous>, transform_indices = @transform_1, window_bounds = array<i64: 56, 128>}, {transform_indices = @transform_2, window_bounds = array<i64: 1, 128>}]} {
    %c0 = arith.constant 0 : index
    %c0_0 = arith.constant 0 : index
    %0 = vector.load %arg1[%c0, %c0_0] : memref<1x128xf32, #tpu.memory_space<vmem>>, vector<1x128xf32>
    %c0_1 = arith.constant 0 : index
    %c0_2 = arith.constant 0 : index
    %1 = vector.load %arg2[%c0_1, %c0_2] : memref<56x128xf32, #tpu.memory_space<vmem>>, vector<56x1xf32>
    %c0_3 = arith.constant 0 : index
    %c1 = arith.constant 1 : index
    %2 = vector.load %arg2[%c0_3, %c1] : memref<56x128xf32, #tpu.memory_space<vmem>>, vector<56x1xf32>
    %c0_4 = arith.constant 0 : index
    %c2 = arith.constant 2 : index
    %3 = vector.load %arg2[%c0_4, %c2] : memref<56x128xf32, #tpu.memory_space<vmem>>, vector<56x1xf32>
    %4 = vector.broadcast %1 : vector<56x1xf32> to vector<56x128xf32>
    %5 = vector.broadcast %0 : vector<1x128xf32> to vector<56x128xf32>
    %6 = arith.mulf %4, %5 : vector<56x128xf32>
    %7 = vector.broadcast %2 : vector<56x1xf32> to vector<56x128xf32>
    %8 = arith.addf %6, %7 : vector<56x128xf32>
    %cst = arith.constant 0.000000e+00 : f32
    %9 = vector.broadcast %cst : f32 to vector<56x128xf32>
    %10 = arith.maximumf %8, %9 : vector<56x128xf32>
    %11 = vector.broadcast %3 : vector<56x1xf32> to vector<56x128xf32>
    %12 = arith.mulf %10, %11 : vector<56x128xf32>
    %cst_5 = arith.constant dense<0.000000e+00> : vector<128xf32>
    %13 = vector.multi_reduction <add>, %12, %cst_5 [0] : vector<56x128xf32> to vector<128xf32>
    %14 = vector.shape_cast %13 : vector<128xf32> to vector<1x128xf32>
    %c0_6 = arith.constant 0 : index
    %c0_7 = arith.constant 0 : index
    %15 = vector.load %arg3[%c0_6, %c0_7] : memref<1x128xf32, #tpu.memory_space<vmem>>, vector<1x128xf32>
    tpu.vector_store %arg3[%c0_6, %c0_7], %14 {strides = array<i32>} : memref<1x128xf32, #tpu.memory_space<vmem>>, vector<1x128xf32>,
    return
  }
  func.func @transform_0(%arg0: i32) -> (i32, i32) {
    %c0_i32 = arith.constant 0 : i32
    %c0_i32_0 = arith.constant 0 : i32
    return %c0_i32, %arg0 : i32, i32
  }
  func.func @transform_1(%arg0: i32) -> (i32, i32) {
    %c0_i32 = arith.constant 0 : i32
    %c0_i32_0 = arith.constant 0 : i32
    %c0_i32_1 = arith.constant 0 : i32
    return %c0_i32, %c0_i32_0 : i32, i32
  }
  func.func @transform_2(%arg0: i32) -> (i32, i32) {
    %c0_i32 = arith.constant 0 : i32
    %c0_i32_0 = arith.constant 0 : i32
    return %c0_i32, %arg0 : i32, i32
  }
}

</mosaic_0001>

<llo_original>
// kernel: basic_mlp_forward.1
$region0: #{basic_mlp_forward.1}
  #allocation0 [shape = 'u32[]', space=smem, size = 0x4, offset = 0x4, fixed_abs, tag = 'smem constant byte address 0x4 - core index']
  #allocation1 [shape = 'u32[144,128]{1,0:T(1,128)}', space=vmem, size = 0x12000, scoped, tag = 'internal scratch']
  %s0 = inlined_call_operand.vmem [shape: f32[1,128], index: 0, kind: input, shape index: {}]
  %s1 = inlined_call_operand.hbm [shape: f32[56,128], index: 1, kind: input, shape index: {}]
  %s2 = inlined_call_operand.vmem [shape: f32[1,128], index: 2, kind: output, shape index: {}]
  %s3 = sld [smem:[#allocation0]]
  $region22: #{basic_mlp_forward.1} parent=0
    _
  %s5 = ssub.s32 1, %s3
  %s6 = scalar_select 0, %s5, %s3
  $region1: #{basic_mlp_forward.1} parent=0
    #allocation2 [shape = 'u8[28672]{0}', space=vmem, size = 0x7000, scoped, tag = 'input window, operand 1, single buffered']
    #allocation3 [shape = 's32[1]{0}', space=sflag, size = 0x4, scoped, tag = 'scoped memory for basic_mlp_forward.1']
    %7 = vsyncpa [#allocation3], 0
    // Predicated region
    $region2: #{basic_mlp_forward.1} parent=1 // pred_check
      _
    $region3: #{basic_mlp_forward.1} parent=1 // pred_check_branch
      %9 = sbr.rel (0) target = $region5
    $region4: #{basic_mlp_forward.1} parent=1 // pred_region
      _
    $region5: #{basic_mlp_forward.1} parent=1 // pred_fallthru
      _
    // Predicated region
    $region6: #{basic_mlp_forward.1} parent=1 // pred_check
      _
    $region7: #{basic_mlp_forward.1} parent=1 // pred_check_branch
      %11 = sbr.rel (0) target = $region9
    $region8: #{basic_mlp_forward.1} parent=1 // pred_region
      %s13 = ssub.s32 896, 896
      %14 = vsyncadd [#allocation3], %s13
      %s15 = sshll.u32 [#allocation2], 4
      %s16 = int_to_ptr.vmem [resolvable:$true] %s15
      %21 = dma.hbm_to_vmem [thread:$0]  %s1, 896, %s16, [#allocation3], 128, 128, 8
    $region9: #{basic_mlp_forward.1} parent=1 // pred_fallthru
      _
    // Predicated region
    $region10: #{basic_mlp_forward.1} parent=1 // pred_check
      _
    $region11: #{basic_mlp_forward.1} parent=1 // pred_check_branch
      %23 = sbr.rel (0) target = $region13
    $region12: #{basic_mlp_forward.1} parent=1 // pred_region
      %24 = dma.done [#allocation3], 896
    $region13: #{basic_mlp_forward.1} parent=1 // pred_fallthru
      _
    %v25 = vld [vmem:[%s0] sm:$0x1]
    %v26 = vld [vmem:[#allocation2] sm:$0xff]
    %v27 = vld [vmem:[#allocation2 + $0x8] sm:$0xff]
    %v28 = vld [vmem:[#allocation2 + $0x10] sm:$0xff]
    %v29 = vld [vmem:[#allocation2 + $0x18] sm:$0xff]
    %v30 = vld [vmem:[#allocation2 + $0x20] sm:$0xff]
    %v31 = vld [vmem:[#allocation2 + $0x28] sm:$0xff]
    %v32 = vld [vmem:[#allocation2 + $0x30] sm:$0xff]
    %34 = vset.pattern.permute.xlu0 0
    %35 = vperm.xlu0 %34, %v26
    %v36 = vpop.permute.xlu0 %35
    %39 = vset.pattern.permute.xlu0 0
    %40 = vperm.xlu0 %39, %v27
    %v41 = vpop.permute.xlu0 %40
    %44 = vset.pattern.permute.xlu0 0
    %45 = vperm.xlu0 %44, %v28
    %v46 = vpop.permute.xlu0 %45
    %49 = vset.pattern.permute.xlu0 0
    %50 = vperm.xlu0 %49, %v29
    %v51 = vpop.permute.xlu0 %50
    %54 = vset.pattern.permute.xlu0 0
    %55 = vperm.xlu0 %54, %v30
    %v56 = vpop.permute.xlu0 %55
    %59 = vset.pattern.permute.xlu0 0
    %60 = vperm.xlu0 %59, %v31
    %v61 = vpop.permute.xlu0 %60
    %64 = vset.pattern.permute.xlu0 0
    %65 = vperm.xlu0 %64, %v32
    %v66 = vpop.permute.xlu0 %65
    %v69 = vlaneseq
    %v70 = vshrl.u32 %v69, 7
    %v71 = vsub.s32 0, %v70
    %v72 = vrot.slane %v25, %v71
    %v74 = vmul.f32 %v36, %v72
    %v75 = vmul.f32 %v41, %v72
    %v76 = vmul.f32 %v46, %v72
    %v77 = vmul.f32 %v51, %v72
    %v78 = vmul.f32 %v56, %v72
    %v79 = vmul.f32 %v61, %v72
    %v80 = vmul.f32 %v66, %v72
    %81 = vset.pattern.permute.xlu0 1
    %82 = vperm.xlu0 %81, %v26
    %v83 = vpop.permute.xlu0 %82
    %85 = vset.pattern.permute.xlu0 1
    %86 = vperm.xlu0 %85, %v27
    %v87 = vpop.permute.xlu0 %86
    %89 = vset.pattern.permute.xlu0 1
    %90 = vperm.xlu0 %89, %v28
    %v91 = vpop.permute.xlu0 %90
    %93 = vset.pattern.permute.xlu0 1
    %94 = vperm.xlu0 %93, %v29
    %v95 = vpop.permute.xlu0 %94
    %97 = vset.pattern.permute.xlu0 1
    %98 = vperm.xlu0 %97, %v30
    %v99 = vpop.permute.xlu0 %98
    %101 = vset.pattern.permute.xlu0 1
    %102 = vperm.xlu0 %101, %v31
    %v103 = vpop.permute.xlu0 %102
    %105 = vset.pattern.permute.xlu0 1
    %106 = vperm.xlu0 %105, %v32
    %v107 = vpop.permute.xlu0 %106
    %v109 = vadd.f32 %v74, %v83
    %v110 = vadd.f32 %v75, %v87
    %v111 = vadd.f32 %v76, %v91
    %v112 = vadd.f32 %v77, %v95
    %v113 = vadd.f32 %v78, %v99
    %v114 = vadd.f32 %v79, %v103
    %v115 = vadd.f32 %v80, %v107
    %v116 = vmax.f32 %v109, 0.0
    %v117 = vmax.f32 %v110, 0.0
    %v118 = vmax.f32 %v111, 0.0
    %v119 = vmax.f32 %v112, 0.0
    %v120 = vmax.f32 %v113, 0.0
    %v121 = vmax.f32 %v114, 0.0
    %v122 = vmax.f32 %v115, 0.0
    %123 = vset.pattern.permute.xlu0 2
    %124 = vperm.xlu0 %123, %v26
    %v125 = vpop.permute.xlu0 %124
    %127 = vset.pattern.permute.xlu0 2
    %128 = vperm.xlu0 %127, %v27
    %v129 = vpop.permute.xlu0 %128
    %131 = vset.pattern.permute.xlu0 2
    %132 = vperm.xlu0 %131, %v28
    %v133 = vpop.permute.xlu0 %132
    %135 = vset.pattern.permute.xlu0 2
    %136 = vperm.xlu0 %135, %v29
    %v137 = vpop.permute.xlu0 %136
    %139 = vset.pattern.permute.xlu0 2
    %140 = vperm.xlu0 %139, %v30
    %v141 = vpop.permute.xlu0 %140
    %143 = vset.pattern.permute.xlu0 2
    %144 = vperm.xlu0 %143, %v31
    %v145 = vpop.permute.xlu0 %144
    %147 = vset.pattern.permute.xlu0 2
    %148 = vperm.xlu0 %147, %v32
    %v149 = vpop.permute.xlu0 %148
    %v151 = vmul.f32 %v116, %v125
    %v152 = vmul.f32 %v117, %v129
    %v153 = vmul.f32 %v118, %v133
    %v154 = vmul.f32 %v119, %v137
    %v155 = vmul.f32 %v120, %v141
    %v156 = vmul.f32 %v121, %v145
    %v157 = vmul.f32 %v122, %v149
    %v158 = vadd.f32 %v151, %v152
    %v159 = vadd.f32 %v158, %v153
    %v160 = vadd.f32 %v159, %v154
    %v161 = vadd.f32 %v160, %v155
    %v162 = vadd.f32 %v161, %v156
    %v163 = vadd.f32 %v162, %v157
    %v164 = vrot.slane %v163, 4
    %v165 = vadd.f32 %v163, %v164
    %v166 = vrot.slane %v165, 2
    %v167 = vadd.f32 %v165, %v166
    %v168 = vrot.slane %v167, 1
    %v169 = vadd.f32 %v167, %v168
    %170 = vst [vmem:[%s2] sm:$0x1] %v169
    // Predicated region
    $region14: #{basic_mlp_forward.1} parent=1 // pred_check
      _
    $region15: #{basic_mlp_forward.1} parent=1 // pred_check_branch
      %172 = sbr.rel (0) target = $region17
    $region16: #{basic_mlp_forward.1} parent=1 // pred_region
      _
    $region17: #{basic_mlp_forward.1} parent=1 // pred_fallthru
      _
    // Predicated region
    $region18: #{basic_mlp_forward.1} parent=1 // pred_check
      _
    $region19: #{basic_mlp_forward.1} parent=1 // pred_check_branch
      %174 = sbr.rel (0) target = $region21
    $region20: #{basic_mlp_forward.1} parent=1 // pred_region
      _
    $region21: #{basic_mlp_forward.1} parent=1 // pred_fallthru
      _
    %175 = vsyncpa [#allocation3], 1

</llo_original>
